<compile_context>
chip_gen: v6e
topology: v6e:2x2x1
jax: 0.10.0
libtpu: 0.0.40
codegen_flags: <defaults>
</compile_context>

<pallas_src>
import jax
import jax.numpy as jnp
from jax.experimental import pallas as pl
from jax.experimental.pallas import tpu as pltpu


def value_net_kernel(x_ref, w1_ref, b1_ref, w2_ref, b2_ref, o_ref):
    # Shapes (batch-on-lanes layout):
    #   x_ref : (obs, TILE_B)     streamed per grid step
    #   w1_ref: (HIDDEN, obs)     resident (PyTorch (out_features, in_features) layout)
    #   b1_ref: (HIDDEN, 1)       resident
    #   w2_ref: (HIDDEN, 1)       resident
    #   b2_ref: (1, 1) in SMEM    scalar
    #   o_ref : (1, 1, TILE_B)    lane-dense output tile
    x = x_ref[...]
    w1 = w1_ref[...]
    obs = x.shape[0]

    # Layer 1: K = obs is tiny -> unrolled VPU broadcast-FMA (outer products) instead of
    # a >98%-zero-padded MXU contraction.
    h = w1[:, 0:1] * x[0:1, :]
    for k in range(1, obs):
        h = h + w1[:, k:k + 1] * x[k:k + 1, :]
    h = h + b1_ref[...]
    h = jnp.maximum(h, 0.0)                               # ReLU, (HIDDEN, TILE_B)

    # Layer 2: N = 1 -> VPU multiply + sublane reduction instead of an MXU matmul.
    out = jnp.sum(h * w2_ref[...], axis=0, keepdims=True) + b2_ref[0, 0]   # (1, TILE_B)
    o_ref[...] = out[None].astype(o_ref.dtype)            # (1, 1, TILE_B)


def _round_up(n, m):
    return ((n + m - 1) // m) * m


def value_network_forward(x, w1, b1, w2, b2, *, max_tile_b=512):
    """ValueNetwork forward: relu(x @ w1.T + b1) @ w2.T + b2.

    Args (PyTorch nn.Linear layouts):
      x : (B, obs) float
      w1: (hidden, obs)   == fc[0].weight
      b1: (hidden,)       == fc[0].bias
      w2: (1, hidden)     == fc[2].weight
      b2: (1,)            == fc[2].bias
    Returns (B, 1) float32.
    """
    B, obs = x.shape
    hidden = w1.shape[0]

    # Batch tiling: lane-dense tiles of up to `max_tile_b` rows (multiple of 128),
    # sized conservatively so double-buffered tiles fit v7x's smaller VMEM easily.
    tile_b = min(max_tile_b, _round_up(max(B, 1), 128))
    B_pad = _round_up(B, tile_b)
    num_tiles = B_pad // tile_b

    # Batch-on-lanes layout: x -> (obs, B_pad), zero-padded along batch.
    x_t = jnp.zeros((obs, B_pad), jnp.float32).at[:, :B].set(x.T.astype(jnp.float32))
    w1_c = w1.astype(jnp.float32)                          # (hidden, obs)
    b1_c = b1.reshape(hidden, 1).astype(jnp.float32)       # (hidden, 1)
    w2_c = w2.reshape(1, hidden).T.astype(jnp.float32)     # (hidden, 1)
    b2_c = b2.reshape(1, 1).astype(jnp.float32)            # (1, 1) scalar

    out = pl.pallas_call(
        value_net_kernel,
        out_shape=jax.ShapeDtypeStruct((num_tiles, 1, tile_b), jnp.float32),
        grid=(num_tiles,),
        in_specs=[
            pl.BlockSpec((obs, tile_b), lambda i: (0, i)),        # x: streamed tiles
            pl.BlockSpec((hidden, obs), lambda i: (0, 0)),        # w1: VMEM-resident
            pl.BlockSpec((hidden, 1), lambda i: (0, 0)),          # b1: VMEM-resident
            pl.BlockSpec((hidden, 1), lambda i: (0, 0)),          # w2: VMEM-resident
            pl.BlockSpec(memory_space=pltpu.MemorySpace.SMEM),    # b2: scalar in SMEM
        ],
        out_specs=pl.BlockSpec((1, 1, tile_b), lambda i: (i, 0, 0)),  # lane-dense output
        compiler_params=pltpu.CompilerParams(
            dimension_semantics=("parallel",),
            vmem_limit_bytes=32 * 1024 * 1024,
        ),
    )(x_t, w1_c, b1_c, w2_c, b2_c)

    # Un-pad and restore PyTorch output shape (B, 1).
    return out.reshape(B_pad)[:B].reshape(B, 1)


if __name__ == "__main__":
    key = jax.random.PRNGKey(0)
    obs_size = 2          # MountainCarContinuous-v0 observation dim
    hidden = 128
    batch = 8

    k_x, k1, k2, k3, k4 = jax.random.split(key, 5)
    x = jax.random.normal(k_x, (batch, obs_size), dtype=jnp.float32)

    # PyTorch nn.Linear default init: U(-1/sqrt(fan_in), 1/sqrt(fan_in)), PyTorch layouts.
    bound1 = 1.0 / jnp.sqrt(obs_size)
    bound2 = 1.0 / jnp.sqrt(hidden)
    w1 = jax.random.uniform(k1, (hidden, obs_size), jnp.float32, -bound1, bound1)
    b1 = jax.random.uniform(k2, (hidden,), jnp.float32, -bound1, bound1)
    w2 = jax.random.uniform(k3, (1, hidden), jnp.float32, -bound2, bound2)
    b2 = jax.random.uniform(k4, (1,), jnp.float32, -bound2, bound2)

    out = value_network_forward(x, w1, b1, w2, b2)
    out = jax.block_until_ready(out)

    # Reference check in plain JAX (matches the PyTorch module semantics).
    ref = jnp.maximum(x @ w1.T + b1, 0.0) @ w2.T + b2
    assert out.shape == (batch, 1)
    assert jnp.allclose(out, ref, atol=1e-5, rtol=1e-5)

    print("KERNEL_OK")
</pallas_src>

<mosaic_0001>
module attributes {stable_mosaic.version = 11 : i64} {
  func.func @value_net_kernel(%arg0: i32, %arg1: memref<2x128xf32, #tpu.memory_space<vmem>>, %arg2: memref<128x2xf32, #tpu.memory_space<vmem>>, %arg3: memref<128x1xf32, #tpu.memory_space<vmem>>, %arg4: memref<128x1xf32, #tpu.memory_space<vmem>>, %arg5: memref<1x1xf32, #tpu.memory_space<smem>>, %arg6: memref<1x1x128xf32, #tpu.memory_space<vmem>>) attributes {dimension_semantics = [#tpu.dimension_semantics<parallel>], iteration_bounds = array<i64: 1>, scalar_prefetch = 0 : i64, scratch_operands = 0 : i64, tpu.core_type = #tpu.core_type<tc>, window_params = [{transform_indices = @transform_0, window_bounds = array<i64: 2, 128>}, {pipeline_mode = #tpu.pipeline_mode<synchronous>, transform_indices = @transform_1, window_bounds = array<i64: 128, 2>}, {pipeline_mode = #tpu.pipeline_mode<synchronous>, transform_indices = @transform_2, window_bounds = array<i64: 128, 1>}, {pipeline_mode = #tpu.pipeline_mode<synchronous>, transform_indices = @transform_3, window_bounds = array<i64: 128, 1>}, {transform_indices = @transform_4, window_bounds = array<i64: 1, 1>}, {transform_indices = @transform_5, window_bounds = array<i64: 1, 1, 128>}]} {
    %c0 = arith.constant 0 : index
    %c0_0 = arith.constant 0 : index
    %0 = vector.load %arg1[%c0, %c0_0] : memref<2x128xf32, #tpu.memory_space<vmem>>, vector<2x128xf32>
    %c0_1 = arith.constant 0 : index
    %c0_2 = arith.constant 0 : index
    %1 = vector.load %arg2[%c0_1, %c0_2] : memref<128x2xf32, #tpu.memory_space<vmem>>, vector<128x2xf32>
    %2 = vector.extract_strided_slice %1 {offsets = [0, 0], sizes = [128, 1], strides = [1, 1]} : vector<128x2xf32> to vector<128x1xf32>
    %3 = vector.extract_strided_slice %0 {offsets = [0, 0], sizes = [1, 128], strides = [1, 1]} : vector<2x128xf32> to vector<1x128xf32>
    %4 = vector.broadcast %2 : vector<128x1xf32> to vector<128x128xf32>
    %5 = vector.broadcast %3 : vector<1x128xf32> to vector<128x128xf32>
    %6 = arith.mulf %4, %5 : vector<128x128xf32>
    %7 = vector.extract_strided_slice %1 {offsets = [0, 1], sizes = [128, 1], strides = [1, 1]} : vector<128x2xf32> to vector<128x1xf32>
    %8 = vector.extract_strided_slice %0 {offsets = [1, 0], sizes = [1, 128], strides = [1, 1]} : vector<2x128xf32> to vector<1x128xf32>
    %9 = vector.broadcast %7 : vector<128x1xf32> to vector<128x128xf32>
    %10 = vector.broadcast %8 : vector<1x128xf32> to vector<128x128xf32>
    %11 = arith.mulf %9, %10 : vector<128x128xf32>
    %12 = arith.addf %6, %11 : vector<128x128xf32>
    %c0_3 = arith.constant 0 : index
    %c0_4 = arith.constant 0 : index
    %13 = vector.load %arg3[%c0_3, %c0_4] : memref<128x1xf32, #tpu.memory_space<vmem>>, vector<128x1xf32>
    %14 = vector.broadcast %13 : vector<128x1xf32> to vector<128x128xf32>
    %15 = arith.addf %12, %14 : vector<128x128xf32>
    %cst = arith.constant 0.000000e+00 : f32
    %16 = vector.broadcast %cst : f32 to vector<128x128xf32>
    %17 = arith.maximumf %15, %16 : vector<128x128xf32>
    %c0_5 = arith.constant 0 : index
    %c0_6 = arith.constant 0 : index
    %18 = vector.load %arg4[%c0_5, %c0_6] : memref<128x1xf32, #tpu.memory_space<vmem>>, vector<128x1xf32>
    %19 = vector.broadcast %18 : vector<128x1xf32> to vector<128x128xf32>
    %20 = arith.mulf %17, %19 : vector<128x128xf32>
    %cst_7 = arith.constant dense<0.000000e+00> : vector<128xf32>
    %21 = vector.multi_reduction <add>, %20, %cst_7 [0] : vector<128x128xf32> to vector<128xf32>
    %22 = vector.shape_cast %21 : vector<128xf32> to vector<1x128xf32>
    %c0_8 = arith.constant 0 : index
    %c0_9 = arith.constant 0 : index
    %23 = memref.load %arg5[%c0_8, %c0_9] : memref<1x1xf32, #tpu.memory_space<smem>>
    %24 = vector.broadcast %23 : f32 to vector<1x128xf32>
    %25 = arith.addf %22, %24 : vector<1x128xf32>
    %26 = vector.shape_cast %25 : vector<1x128xf32> to vector<1x1x128xf32>
    %c0_10 = arith.constant 0 : index
    %c0_11 = arith.constant 0 : index
    %c0_12 = arith.constant 0 : index
    %27 = vector.load %arg6[%c0_10, %c0_11, %c0_12] : memref<1x1x128xf32, #tpu.memory_space<vmem>>, vector<1x1x128xf32>
    tpu.vector_store %arg6[%c0_10, %c0_11, %c0_12], %26 {strides = array<i32>} : memref<1x1x128xf32, #tpu.memory_space<vmem>>, vector<1x1x128xf32>,
    return
  }
  func.func @transform_0(%arg0: i32) -> (i32, i32) {
    %c0_i32 = arith.constant 0 : i32
    %c0_i32_0 = arith.constant 0 : i32
    return %c0_i32, %arg0 : i32, i32
  }
  func.func @transform_1(%arg0: i32) -> (i32, i32) {
    %c0_i32 = arith.constant 0 : i32
    %c0_i32_0 = arith.constant 0 : i32
    %c0_i32_1 = arith.constant 0 : i32
    return %c0_i32, %c0_i32_0 : i32, i32
  }
  func.func @transform_2(%arg0: i32) -> (i32, i32) {
    %c0_i32 = arith.constant 0 : i32
    %c0_i32_0 = arith.constant 0 : i32
    %c0_i32_1 = arith.constant 0 : i32
    return %c0_i32, %c0_i32_0 : i32, i32
  }
  func.func @transform_3(%arg0: i32) -> (i32, i32) {
    %c0_i32 = arith.constant 0 : i32
    %c0_i32_0 = arith.constant 0 : i32
    %c0_i32_1 = arith.constant 0 : i32
    return %c0_i32, %c0_i32_0 : i32, i32
  }
  func.func @transform_4(%arg0: i32) -> (i32, i32) {
    %c0_i32 = arith.constant 0 : i32
    %c0_i32_0 = arith.constant 0 : i32
    %c0_i32_1 = arith.constant 0 : i32
    return %c0_i32, %c0_i32_0 : i32, i32
  }
  func.func @transform_5(%arg0: i32) -> (i32, i32, i32) {
    %c0_i32 = arith.constant 0 : i32
    %c0_i32_0 = arith.constant 0 : i32
    %c0_i32_1 = arith.constant 0 : i32
    return %arg0, %c0_i32, %c0_i32_0 : i32, i32, i32
  }
}

</mosaic_0001>

<llo_original>
// kernel: tpu_custom_call.1
$region0: #{tpu_custom_call.1}
  #allocation0 [shape = 'u32[]', space=smem, size = 0x4, offset = 0x4, fixed_abs, tag = 'smem constant byte address 0x4 - core index']
  #allocation1 [shape = 'u32[144,128]{1,0:T(1,128)}', space=vmem, size = 0x12000, scoped, tag = 'internal scratch']
  #allocation2 [shape = 'f32[1,1]{1,0:T(1,128)S(6)}', space=smem, size = 0x200, scoped, tag = 'scoped memory for tpu_custom_call.1']
  %s0 = inlined_call_operand.vmem [shape: f32[2,128], index: 0, kind: input, shape index: {}]
  %s1 = inlined_call_operand.vmem [shape: f32[128,2], index: 1, kind: input, shape index: {}]
  %s2 = inlined_call_operand.vmem [shape: f32[128,1], index: 2, kind: input, shape index: {}]
  %s3 = inlined_call_operand.vmem [shape: f32[128,1], index: 3, kind: input, shape index: {}]
  %s4 = inlined_call_operand.<no memory space> [shape: f32[1,1], index: 4, kind: input, shape index: {}]
  %s5 = inlined_call_operand.hbm [shape: f32[1,1,128], index: 5, kind: output, shape index: {}]
  %s6 = sld [smem:[#allocation0]]
  $region30: #{tpu_custom_call.1} parent=0
    _
  %s8 = ssub.s32 1, %s6
  %s9 = scalar_select 0, %s8, %s6
  %10 = sst [smem:[#allocation2]] %s4
  $region1: #{tpu_custom_call.1} parent=0
    #allocation3 [shape = 'u8[512]{0}', space=vmem, size = 0x400, scoped, tag = 'output window, operand 0, single buffered']
    #allocation4 [shape = 's32[1]{0}', space=sflag, size = 0x4, scoped, tag = 'scoped memory for tpu_custom_call.1']
    %11 = vsyncpa [#allocation4], 0
    // Predicated region
    $region2: #{tpu_custom_call.1} parent=1 // pred_check
      _
    $region3: #{tpu_custom_call.1} parent=1 // pred_check_branch
      %13 = sbr.rel (0) target = $region5
    $region4: #{tpu_custom_call.1} parent=1 // pred_region
      _
    $region5: #{tpu_custom_call.1} parent=1 // pred_fallthru
      _
    // Predicated region
    $region6: #{tpu_custom_call.1} parent=1 // pred_check
      _
    $region7: #{tpu_custom_call.1} parent=1 // pred_check_branch
      %15 = sbr.rel (0) target = $region9
    $region8: #{tpu_custom_call.1} parent=1 // pred_region
      _
    $region9: #{tpu_custom_call.1} parent=1 // pred_fallthru
      _
    // Predicated region
    $region10: #{tpu_custom_call.1} parent=1 // pred_check
      _
    $region11: #{tpu_custom_call.1} parent=1 // pred_check_branch
      %17 = sbr.rel (0) target = $region13
    $region12: #{tpu_custom_call.1} parent=1 // pred_region
      _
    $region13: #{tpu_custom_call.1} parent=1 // pred_fallthru
      _
    // Predicated region
    $region14: #{tpu_custom_call.1} parent=1 // pred_check
      _
    $region15: #{tpu_custom_call.1} parent=1 // pred_check_branch
      %19 = sbr.rel (0) target = $region17
    $region16: #{tpu_custom_call.1} parent=1 // pred_region
      _
    $region17: #{tpu_custom_call.1} parent=1 // pred_fallthru
      _
    // Predicated region
    $region18: #{tpu_custom_call.1} parent=1 // pred_check
      _
    $region19: #{tpu_custom_call.1} parent=1 // pred_check_branch
      %21 = sbr.rel (0) target = $region21
    $region20: #{tpu_custom_call.1} parent=1 // pred_region
      _
    $region21: #{tpu_custom_call.1} parent=1 // pred_fallthru
      _
    %v22 = vld [vmem:[%s0] sm:$0x3]
    %v23 = vld [vmem:[%s1] sm:$0xff]
    %v24 = vld [vmem:[%s1 + $0x8] sm:$0xff]
    %v25 = vld [vmem:[%s1 + $0x10] sm:$0xff]
    %v26 = vld [vmem:[%s1 + $0x18] sm:$0xff]
    %v27 = vld [vmem:[%s1 + $0x20] sm:$0xff]
    %v28 = vld [vmem:[%s1 + $0x28] sm:$0xff]
    %v29 = vld [vmem:[%s1 + $0x30] sm:$0xff]
    %v30 = vld [vmem:[%s1 + $0x38] sm:$0xff]
    %v31 = vld [vmem:[%s1 + $0x40] sm:$0xff]
    %v32 = vld [vmem:[%s1 + $0x48] sm:$0xff]
    %v33 = vld [vmem:[%s1 + $0x50] sm:$0xff]
    %v34 = vld [vmem:[%s1 + $0x58] sm:$0xff]
    %v35 = vld [vmem:[%s1 + $0x60] sm:$0xff]
    %v36 = vld [vmem:[%s1 + $0x68] sm:$0xff]
    %v37 = vld [vmem:[%s1 + $0x70] sm:$0xff]
    %v38 = vld [vmem:[%s1 + $0x78] sm:$0xff]
    %40 = vset.pattern.permute.xlu0 0
    %41 = vperm.xlu0 %40, %v23
    %v42 = vpop.permute.xlu0 %41
    %45 = vset.pattern.permute.xlu0 0
    %46 = vperm.xlu0 %45, %v24
    %v47 = vpop.permute.xlu0 %46
    %50 = vset.pattern.permute.xlu0 0
    %51 = vperm.xlu0 %50, %v25
    %v52 = vpop.permute.xlu0 %51
    %55 = vset.pattern.permute.xlu0 0
    %56 = vperm.xlu0 %55, %v26
    %v57 = vpop.permute.xlu0 %56
    %60 = vset.pattern.permute.xlu0 0
    %61 = vperm.xlu0 %60, %v27
    %v62 = vpop.permute.xlu0 %61
    %65 = vset.pattern.permute.xlu0 0
    %66 = vperm.xlu0 %65, %v28
    %v67 = vpop.permute.xlu0 %66
    %70 = vset.pattern.permute.xlu0 0
    %71 = vperm.xlu0 %70, %v29
    %v72 = vpop.permute.xlu0 %71
    %75 = vset.pattern.permute.xlu0 0
    %76 = vperm.xlu0 %75, %v30
    %v77 = vpop.permute.xlu0 %76
    %80 = vset.pattern.permute.xlu0 0
    %81 = vperm.xlu0 %80, %v31
    %v82 = vpop.permute.xlu0 %81
    %85 = vset.pattern.permute.xlu0 0
    %86 = vperm.xlu0 %85, %v32
    %v87 = vpop.permute.xlu0 %86
    %90 = vset.pattern.permute.xlu0 0
    %91 = vperm.xlu0 %90, %v33
    %v92 = vpop.permute.xlu0 %91
    %95 = vset.pattern.permute.xlu0 0
    %96 = vperm.xlu0 %95, %v34
    %v97 = vpop.permute.xlu0 %96
    %100 = vset.pattern.permute.xlu0 0
    %101 = vperm.xlu0 %100, %v35
    %v102 = vpop.permute.xlu0 %101
    %105 = vset.pattern.permute.xlu0 0
    %106 = vperm.xlu0 %105, %v36
    %v107 = vpop.permute.xlu0 %106
    %110 = vset.pattern.permute.xlu0 0
    %111 = vperm.xlu0 %110, %v37
    %v112 = vpop.permute.xlu0 %111
    %115 = vset.pattern.permute.xlu0 0
    %116 = vperm.xlu0 %115, %v38
    %v117 = vpop.permute.xlu0 %116
    %v119 = vlaneseq
    %v120 = vshrl.u32 %v119, 7
    %v121 = vsub.s32 0, %v120
    %v122 = vrot.slane %v22, %v121
    %v123 = vmul.f32 %v42, %v122
    %v124 = vmul.f32 %v47, %v122
    %v125 = vmul.f32 %v52, %v122
    %v126 = vmul.f32 %v57, %v122
    %v127 = vmul.f32 %v62, %v122
    %v128 = vmul.f32 %v67, %v122
    %v129 = vmul.f32 %v72, %v122
    %v130 = vmul.f32 %v77, %v122
    %v131 = vmul.f32 %v82, %v122
    %v132 = vmul.f32 %v87, %v122
    %v133 = vmul.f32 %v92, %v122
    %v134 = vmul.f32 %v97, %v122
    %v135 = vmul.f32 %v102, %v122
    %v136 = vmul.f32 %v107, %v122
    %v137 = vmul.f32 %v112, %v122
    %v138 = vmul.f32 %v117, %v122
    %139 = vset.pattern.permute.xlu0 1
    %140 = vperm.xlu0 %139, %v23
    %v141 = vpop.permute.xlu0 %140
    %143 = vset.pattern.permute.xlu0 1
    %144 = vperm.xlu0 %143, %v24
    %v145 = vpop.permute.xlu0 %144
    %147 = vset.pattern.permute.xlu0 1
    %148 = vperm.xlu0 %147, %v25
    %v149 = vpop.permute.xlu0 %148
    %151 = vset.pattern.permute.xlu0 1
    %152 = vperm.xlu0 %151, %v26
    %v153 = vpop.permute.xlu0 %152
    %155 = vset.pattern.permute.xlu0 1
    %156 = vperm.xlu0 %155, %v27
    %v157 = vpop.permute.xlu0 %156
    %159 = vset.pattern.permute.xlu0 1
    %160 = vperm.xlu0 %159, %v28
    %v161 = vpop.permute.xlu0 %160
    %163 = vset.pattern.permute.xlu0 1
    %164 = vperm.xlu0 %163, %v29
    %v165 = vpop.permute.xlu0 %164
    %167 = vset.pattern.permute.xlu0 1
    %168 = vperm.xlu0 %167, %v30
    %v169 = vpop.permute.xlu0 %168
    %171 = vset.pattern.permute.xlu0 1
    %172 = vperm.xlu0 %171, %v31
    %v173 = vpop.permute.xlu0 %172
    %175 = vset.pattern.permute.xlu0 1
    %176 = vperm.xlu0 %175, %v32
    %v177 = vpop.permute.xlu0 %176
    %179 = vset.pattern.permute.xlu0 1
    %180 = vperm.xlu0 %179, %v33
    %v181 = vpop.permute.xlu0 %180
    %183 = vset.pattern.permute.xlu0 1
    %184 = vperm.xlu0 %183, %v34
    %v185 = vpop.permute.xlu0 %184
    %187 = vset.pattern.permute.xlu0 1
    %188 = vperm.xlu0 %187, %v35
    %v189 = vpop.permute.xlu0 %188
    %191 = vset.pattern.permute.xlu0 1
    %192 = vperm.xlu0 %191, %v36
    %v193 = vpop.permute.xlu0 %192
    %195 = vset.pattern.permute.xlu0 1
    %196 = vperm.xlu0 %195, %v37
    %v197 = vpop.permute.xlu0 %196
    %199 = vset.pattern.permute.xlu0 1
    %200 = vperm.xlu0 %199, %v38
    %v201 = vpop.permute.xlu0 %200
    %v203 = vlaneseq
    %v204 = vshrl.u32 %v203, 7
    %v205 = vsub.s32 1, %v204
    %v206 = vrot.slane %v22, %v205
    %v207 = vmul.f32 %v141, %v206
    %v208 = vmul.f32 %v145, %v206
    %v209 = vmul.f32 %v149, %v206
    %v210 = vmul.f32 %v153, %v206
    %v211 = vmul.f32 %v157, %v206
    %v212 = vmul.f32 %v161, %v206
    %v213 = vmul.f32 %v165, %v206
    %v214 = vmul.f32 %v169, %v206
    %v215 = vmul.f32 %v173, %v206
    %v216 = vmul.f32 %v177, %v206
    %v217 = vmul.f32 %v181, %v206
    %v218 = vmul.f32 %v185, %v206
    %v219 = vmul.f32 %v189, %v206
    %v220 = vmul.f32 %v193, %v206
    %v221 = vmul.f32 %v197, %v206
    %v222 = vmul.f32 %v201, %v206
    %v223 = vadd.f32 %v123, %v207
    %v224 = vadd.f32 %v124, %v208
    %v225 = vadd.f32 %v125, %v209
    %v226 = vadd.f32 %v126, %v210
    %v227 = vadd.f32 %v127, %v211
    %v228 = vadd.f32 %v128, %v212
    %v229 = vadd.f32 %v129, %v213
    %v230 = vadd.f32 %v130, %v214
    %v231 = vadd.f32 %v131, %v215
    %v232 = vadd.f32 %v132, %v216
    %v233 = vadd.f32 %v133, %v217
    %v234 = vadd.f32 %v134, %v218
    %v235 = vadd.f32 %v135, %v219
    %v236 = vadd.f32 %v136, %v220
    %v237 = vadd.f32 %v137, %v221
    %v238 = vadd.f32 %v138, %v222
    %v239 = vld [vmem:[%s2] sm:$0xff]
    %v240 = vld [vmem:[%s2 + $0x8] sm:$0xff]
    %v241 = vld [vmem:[%s2 + $0x10] sm:$0xff]
    %v242 = vld [vmem:[%s2 + $0x18] sm:$0xff]
    %v243 = vld [vmem:[%s2 + $0x20] sm:$0xff]
    %v244 = vld [vmem:[%s2 + $0x28] sm:$0xff]
    %v245 = vld [vmem:[%s2 + $0x30] sm:$0xff]
    %v246 = vld [vmem:[%s2 + $0x38] sm:$0xff]
    %v247 = vld [vmem:[%s2 + $0x40] sm:$0xff]
    %v248 = vld [vmem:[%s2 + $0x48] sm:$0xff]
    %v249 = vld [vmem:[%s2 + $0x50] sm:$0xff]
    %v250 = vld [vmem:[%s2 + $0x58] sm:$0xff]
    %v251 = vld [vmem:[%s2 + $0x60] sm:$0xff]
    %v252 = vld [vmem:[%s2 + $0x68] sm:$0xff]
    %v253 = vld [vmem:[%s2 + $0x70] sm:$0xff]
    %v254 = vld [vmem:[%s2 + $0x78] sm:$0xff]
    %256 = vset.pattern.permute.xlu0 0
    %257 = vperm.xlu0 %256, %v239
    %v258 = vpop.permute.xlu0 %257
    %261 = vset.pattern.permute.xlu0 0
    %262 = vperm.xlu0 %261, %v240
    %v263 = vpop.permute.xlu0 %262
    %266 = vset.pattern.permute.xlu0 0
    %267 = vperm.xlu0 %266, %v241
    %v268 = vpop.permute.xlu0 %267
    %271 = vset.pattern.permute.xlu0 0
    %272 = vperm.xlu0 %271, %v242
    %v273 = vpop.permute.xlu0 %272
    %276 = vset.pattern.permute.xlu0 0
    %277 = vperm.xlu0 %276, %v243
    %v278 = vpop.permute.xlu0 %277
    %281 = vset.pattern.permute.xlu0 0
    %282 = vperm.xlu0 %281, %v244
    %v283 = vpop.permute.xlu0 %282
    %286 = vset.pattern.permute.xlu0 0
    %287 = vperm.xlu0 %286, %v245
    %v288 = vpop.permute.xlu0 %287
    %291 = vset.pattern.permute.xlu0 0
    %292 = vperm.xlu0 %291, %v246
    %v293 = vpop.permute.xlu0 %292
    %296 = vset.pattern.permute.xlu0 0
    %297 = vperm.xlu0 %296, %v247
    %v298 = vpop.permute.xlu0 %297
    %301 = vset.pattern.permute.xlu0 0
    %302 = vperm.xlu0 %301, %v248
    %v303 = vpop.permute.xlu0 %302
    %306 = vset.pattern.permute.xlu0 0
    %307 = vperm.xlu0 %306, %v249
    %v308 = vpop.permute.xlu0 %307
    %311 = vset.pattern.permute.xlu0 0
    %312 = vperm.xlu0 %311, %v250
    %v313 = vpop.permute.xlu0 %312
    %316 = vset.pattern.permute.xlu0 0
    %317 = vperm.xlu0 %316, %v251
    %v318 = vpop.permute.xlu0 %317
    %321 = vset.pattern.permute.xlu0 0
    %322 = vperm.xlu0 %321, %v252
    %v323 = vpop.permute.xlu0 %322
    %326 = vset.pattern.permute.xlu0 0
    %327 = vperm.xlu0 %326, %v253
    %v328 = vpop.permute.xlu0 %327
    %331 = vset.pattern.permute.xlu0 0
    %332 = vperm.xlu0 %331, %v254
    %v333 = vpop.permute.xlu0 %332
    %v335 = vadd.f32 %v223, %v258
    %v336 = vadd.f32 %v224, %v263
    %v337 = vadd.f32 %v225, %v268
    %v338 = vadd.f32 %v226, %v273
    %v339 = vadd.f32 %v227, %v278
    %v340 = vadd.f32 %v228, %v283
    %v341 = vadd.f32 %v229, %v288
    %v342 = vadd.f32 %v230, %v293
    %v343 = vadd.f32 %v231, %v298
    %v344 = vadd.f32 %v232, %v303
    %v345 = vadd.f32 %v233, %v308
    %v346 = vadd.f32 %v234, %v313
    %v347 = vadd.f32 %v235, %v318
    %v348 = vadd.f32 %v236, %v323
    %v349 = vadd.f32 %v237, %v328
    %v350 = vadd.f32 %v238, %v333
    %v351 = vmax.f32 %v335, 0.0
    %v352 = vmax.f32 %v336, 0.0
    %v353 = vmax.f32 %v337, 0.0
    %v354 = vmax.f32 %v338, 0.0
    %v355 = vmax.f32 %v339, 0.0
    %v356 = vmax.f32 %v340, 0.0
    %v357 = vmax.f32 %v341, 0.0
    %v358 = vmax.f32 %v342, 0.0
    %v359 = vmax.f32 %v343, 0.0
    %v360 = vmax.f32 %v344, 0.0
    %v361 = vmax.f32 %v345, 0.0
    %v362 = vmax.f32 %v346, 0.0
    %v363 = vmax.f32 %v347, 0.0
    %v364 = vmax.f32 %v348, 0.0
    %v365 = vmax.f32 %v349, 0.0
    %v366 = vmax.f32 %v350, 0.0
    %v367 = vld [vmem:[%s3] sm:$0xff]
    %v368 = vld [vmem:[%s3 + $0x8] sm:$0xff]
    %v369 = vld [vmem:[%s3 + $0x10] sm:$0xff]
    %v370 = vld [vmem:[%s3 + $0x18] sm:$0xff]
    %v371 = vld [vmem:[%s3 + $0x20] sm:$0xff]
    %v372 = vld [vmem:[%s3 + $0x28] sm:$0xff]
    %v373 = vld [vmem:[%s3 + $0x30] sm:$0xff]
    %v374 = vld [vmem:[%s3 + $0x38] sm:$0xff]
    %v375 = vld [vmem:[%s3 + $0x40] sm:$0xff]
    %v376 = vld [vmem:[%s3 + $0x48] sm:$0xff]
    %v377 = vld [vmem:[%s3 + $0x50] sm:$0xff]
    %v378 = vld [vmem:[%s3 + $0x58] sm:$0xff]
    %v379 = vld [vmem:[%s3 + $0x60] sm:$0xff]
    %v380 = vld [vmem:[%s3 + $0x68] sm:$0xff]
    %v381 = vld [vmem:[%s3 + $0x70] sm:$0xff]
    %v382 = vld [vmem:[%s3 + $0x78] sm:$0xff]
    %384 = vset.pattern.permute.xlu0 0
    %385 = vperm.xlu0 %384, %v367
    %v386 = vpop.permute.xlu0 %385
    %389 = vset.pattern.permute.xlu0 0
    %390 = vperm.xlu0 %389, %v368
    %v391 = vpop.permute.xlu0 %390
    %394 = vset.pattern.permute.xlu0 0
    %395 = vperm.xlu0 %394, %v369
    %v396 = vpop.permute.xlu0 %395
    %399 = vset.pattern.permute.xlu0 0
    %400 = vperm.xlu0 %399, %v370
    %v401 = vpop.permute.xlu0 %400
    %404 = vset.pattern.permute.xlu0 0
    %405 = vperm.xlu0 %404, %v371
    %v406 = vpop.permute.xlu0 %405
    %409 = vset.pattern.permute.xlu0 0
    %410 = vperm.xlu0 %409, %v372
    %v411 = vpop.permute.xlu0 %410
    %414 = vset.pattern.permute.xlu0 0
    %415 = vperm.xlu0 %414, %v373
    %v416 = vpop.permute.xlu0 %415
    %419 = vset.pattern.permute.xlu0 0
    %420 = vperm.xlu0 %419, %v374
    %v421 = vpop.permute.xlu0 %420
    %424 = vset.pattern.permute.xlu0 0
    %425 = vperm.xlu0 %424, %v375
    %v426 = vpop.permute.xlu0 %425
    %429 = vset.pattern.permute.xlu0 0
    %430 = vperm.xlu0 %429, %v376
    %v431 = vpop.permute.xlu0 %430
    %434 = vset.pattern.permute.xlu0 0
    %435 = vperm.xlu0 %434, %v377
    %v436 = vpop.permute.xlu0 %435
    %439 = vset.pattern.permute.xlu0 0
    %440 = vperm.xlu0 %439, %v378
    %v441 = vpop.permute.xlu0 %440
    %444 = vset.pattern.permute.xlu0 0
    %445 = vperm.xlu0 %444, %v379
    %v446 = vpop.permute.xlu0 %445
    %449 = vset.pattern.permute.xlu0 0
    %450 = vperm.xlu0 %449, %v380
    %v451 = vpop.permute.xlu0 %450
    %454 = vset.pattern.permute.xlu0 0
    %455 = vperm.xlu0 %454, %v381
    %v456 = vpop.permute.xlu0 %455
    %459 = vset.pattern.permute.xlu0 0
    %460 = vperm.xlu0 %459, %v382
    %v461 = vpop.permute.xlu0 %460
    %v463 = vmul.f32 %v351, %v386
    %v464 = vmul.f32 %v352, %v391
    %v465 = vmul.f32 %v353, %v396
    %v466 = vmul.f32 %v354, %v401
    %v467 = vmul.f32 %v355, %v406
    %v468 = vmul.f32 %v356, %v411
    %v469 = vmul.f32 %v357, %v416
    %v470 = vmul.f32 %v358, %v421
    %v471 = vmul.f32 %v359, %v426
    %v472 = vmul.f32 %v360, %v431
    %v473 = vmul.f32 %v361, %v436
    %v474 = vmul.f32 %v362, %v441
    %v475 = vmul.f32 %v363, %v446
    %v476 = vmul.f32 %v364, %v451
    %v477 = vmul.f32 %v365, %v456
    %v478 = vmul.f32 %v366, %v461
    %v479 = vadd.f32 %v463, %v464
    %v480 = vadd.f32 %v479, %v465
    %v481 = vadd.f32 %v480, %v466
    %v482 = vadd.f32 %v481, %v467
    %v483 = vadd.f32 %v482, %v468
    %v484 = vadd.f32 %v483, %v469
    %v485 = vadd.f32 %v484, %v470
    %v486 = vadd.f32 %v485, %v471
    %v487 = vadd.f32 %v486, %v472
    %v488 = vadd.f32 %v487, %v473
    %v489 = vadd.f32 %v488, %v474
    %v490 = vadd.f32 %v489, %v475
    %v491 = vadd.f32 %v490, %v476
    %v492 = vadd.f32 %v491, %v477
    %v493 = vadd.f32 %v492, %v478
    %v494 = vrot.slane %v493, 4
    %v495 = vadd.f32 %v493, %v494
    %v496 = vrot.slane %v495, 2
    %v497 = vadd.f32 %v495, %v496
    %v498 = vrot.slane %v497, 1
    %v499 = vadd.f32 %v497, %v498
    %s500 = sld [smem:[#allocation2]]
    %v501 = vstv %s500
    %v502 = vadd.f32 %v499, %v501
    %503 = vst [vmem:[#allocation3] sm:$0x1] %v502
    // Predicated region
    $region22: #{tpu_custom_call.1} parent=1 // pred_check
      _
    $region23: #{tpu_custom_call.1} parent=1 // pred_check_branch
      %505 = sbr.rel (0) target = $region25
    $region24: #{tpu_custom_call.1} parent=1 // pred_region
      %s507 = ssub.s32 16, 16
      %508 = vsyncadd [#allocation4], %s507
      %s510 = sshll.u32 [#allocation3], 4
      %s511 = int_to_ptr.vmem [resolvable:$true] %s510
      %513 = dma.vmem_to_hbm [thread:$0]  %s511, 16, %s5, [#allocation4]
    $region25: #{tpu_custom_call.1} parent=1 // pred_fallthru
      _
    // Predicated region
    $region26: #{tpu_custom_call.1} parent=1 // pred_check
      _
    $region27: #{tpu_custom_call.1} parent=1 // pred_check_branch
      %515 = sbr.rel (0) target = $region29
    $region28: #{tpu_custom_call.1} parent=1 // pred_region
      %516 = dma.done [#allocation4], 16
    $region29: #{tpu_custom_call.1} parent=1 // pred_fallthru
      _
    %517 = vsyncpa [#allocation4], 1

</llo_original>
